<compile_context>
chip_gen: v7x
topology: tpu7x:2x2x1
jax: 0.10.0
libtpu: 0.0.40
codegen_flags: <defaults>
</compile_context>

<pallas_src>
import functools
import math

import jax
import jax.numpy as jnp
from jax import lax
from jax.experimental import pallas as pl
from jax.experimental.pallas import tpu as pltpu


def _vmem_limit_bytes():
    # ~75% of physical VMEM, capped at 100 MiB (v5e/v6e: 128 MiB, v7x: 64 MiB).
    try:
        cap = pltpu.get_tpu_info().vmem_capacity_bytes
        return int(min(cap * 3 // 4, 100 * 1024 * 1024))
    except Exception:
        return 48 * 1024 * 1024


_VMEM_LIMIT = _vmem_limit_bytes()


def _pick_tile(dim, candidates):
    """Largest candidate that exactly divides `dim`; fall back to the full dim."""
    for c in candidates:
        if c <= dim and dim % c == 0:
            return c
    return dim


# ------------------------- fused QKV projection (y = x @ W) -------------------------

def _matmul_full_k_kernel(x_ref, w_ref, o_ref):
    o_ref[...] = jnp.dot(x_ref[...], w_ref[...],
                         preferred_element_type=jnp.float32).astype(o_ref.dtype)


def _matmul_ktiled_kernel(x_ref, w_ref, o_ref, acc_ref):
    @pl.when(pl.program_id(2) == 0)
    def _init():
        acc_ref[...] = jnp.zeros_like(acc_ref)

    acc_ref[...] += jnp.dot(x_ref[...], w_ref[...],
                            preferred_element_type=jnp.float32)

    @pl.when(pl.program_id(2) == pl.num_programs(2) - 1)
    def _finalize():
        o_ref[...] = acc_ref[...].astype(o_ref.dtype)


def linear_nn(x2d, w):
    """y = x @ W.  x2d: (M, K), w: (K, N) -- weight pre-transposed at load time."""
    M, K = x2d.shape
    K2, N = w.shape
    assert K == K2

    tm = _pick_tile(M, (512, 256, 128, 64, 32, 16, 8))
    tn = _pick_tile(N, (512, 256, 128))
    itemsize = jnp.dtype(x2d.dtype).itemsize
    cost = pl.CostEstimate(flops=2 * M * N * K, transcendentals=0,
                           bytes_accessed=(M * K + K * N + M * N) * itemsize)

    if K <= 2048:
        # Full-K reduction: no arbitrary axis, no accumulator scratch.
        block_bytes = 2 * (tm * K + K * tn + tm * tn) * itemsize  # ~double-buffered
        assert block_bytes < _VMEM_LIMIT, "linear_nn tile does not fit VMEM"
        grid_spec = pltpu.PrefetchScalarGridSpec(
            num_scalar_prefetch=0,
            grid=(M // tm, N // tn),
            in_specs=[pl.BlockSpec((tm, K), lambda i, j: (i, 0)),
                      pl.BlockSpec((K, tn), lambda i, j: (0, j))],
            out_specs=pl.BlockSpec((tm, tn), lambda i, j: (i, j)),
        )
        kernel = _matmul_full_k_kernel
        dims = ("parallel", "parallel")
    else:
        tk = _pick_tile(K, (1024, 512, 256, 128))
        grid_spec = pltpu.PrefetchScalarGridSpec(
            num_scalar_prefetch=0,
            grid=(M // tm, N // tn, K // tk),
            in_specs=[pl.BlockSpec((tm, tk), lambda i, j, k: (i, k)),
                      pl.BlockSpec((tk, tn), lambda i, j, k: (k, j))],
            out_specs=pl.BlockSpec((tm, tn), lambda i, j, k: (i, j)),
            scratch_shapes=[pltpu.VMEM((tm, tn), jnp.float32)],
        )
        kernel = _matmul_ktiled_kernel
        dims = ("parallel", "parallel", "arbitrary")

    return pl.pallas_call(
        kernel,
        out_shape=jax.ShapeDtypeStruct((M, N), x2d.dtype),
        grid_spec=grid_spec,
        compiler_params=pltpu.CompilerParams(dimension_semantics=dims,
                                             vmem_limit_bytes=_VMEM_LIMIT),
        cost_estimate=cost,
    )(x2d, w)


# ---------------- QKV split + RoPE (Q and K rotated ONCE) + head relayout ----------------

def _rotate_half(x):
    # TODO(synk): for head_dim >= 128 use pltpu.roll(x, D//2, axis=-1) with a
    # sign-folded sin to keep the rotation on the XLU instead of slice+concat.
    d = x.shape[-1]
    x1 = x[:, : d // 2]
    x2 = x[:, d // 2:]
    return jnp.concatenate([-x2, x1], axis=-1)


def _rope_split_kernel(qkv_ref, cs_ref, q_ref, k_ref, v_ref, *,
                       num_heads, num_kv_heads, head_dim, scale):
    G = num_heads // num_kv_heads
    D = head_dim
    nq = num_heads * D
    nkv = num_kv_heads * D

    x = qkv_ref[...]                                   # (ts, C)
    cs = cs_ref[...].astype(jnp.float32)               # (ts, 2*D)  packed cos|sin
    cos = cs[:, :D]
    sin = cs[:, D:]
    out_dtype = q_ref.dtype

    for h in range(num_kv_heads):                      # small static loop
        # K: rotate once here so the attention inner loop never re-applies RoPE.
        kh = x[:, nq + h * D: nq + (h + 1) * D].astype(jnp.float32)
        k_ref[h] = (kh * cos + _rotate_half(kh) * sin).astype(out_dtype)
        # V: pure relayout.
        v_ref[h] = x[:, nq + nkv + h * D: nq + nkv + (h + 1) * D].astype(out_dtype)
        # Q: rotate + fold in 1/sqrt(D), grouped per kv head, stored in MXU dtype.
        q_parts = []
        for g in range(G):
            c0 = (h * G + g) * D
            qh = x[:, c0: c0 + D].astype(jnp.float32)
            q_parts.append((qh * cos + _rotate_half(qh) * sin) * scale)
        q_ref[h] = jnp.concatenate(q_parts, axis=-1).astype(out_dtype)


def rope_split(qkv3, cos_sin, num_heads, num_kv_heads, head_dim, scale):
    """qkv3: (B, S, C) fused projection output; cos_sin: (S, 2*D).
    Returns q_r (B, Hkv, S, G*D) [RoPE'd, scaled], k_r (B, Hkv, S, D) [RoPE'd],
    v_r (B, Hkv, S, D)."""
    B, S, C = qkv3.shape
    G = num_heads // num_kv_heads
    D = head_dim
    Hkv = num_kv_heads
    dt = qkv3.dtype

    ts = _pick_tile(S, (256, 128, 64, 32, 16, 8))
    itemsize = jnp.dtype(dt).itemsize
    assert 4 * ts * C * itemsize < _VMEM_LIMIT, "rope_split tile does not fit VMEM"

    kernel = functools.partial(_rope_split_kernel, num_heads=num_heads,
                               num_kv_heads=num_kv_heads, head_dim=head_dim,
                               scale=scale)

    return pl.pallas_call(
        kernel,
        out_shape=(jax.ShapeDtypeStruct((B, Hkv, S, G * D), dt),
                   jax.ShapeDtypeStruct((B, Hkv, S, D), dt),
                   jax.ShapeDtypeStruct((B, Hkv, S, D), dt)),
        grid_spec=pltpu.PrefetchScalarGridSpec(
            num_scalar_prefetch=0,
            grid=(B, S // ts),
            in_specs=[
                pl.BlockSpec((None, ts, C), lambda b, si: (b, si, 0)),
                pl.BlockSpec((ts, 2 * D), lambda b, si: (si, 0)),
            ],
            out_specs=[
                pl.BlockSpec((None, Hkv, ts, G * D), lambda b, si: (b, 0, si, 0)),
                pl.BlockSpec((None, Hkv, ts, D), lambda b, si: (b, 0, si, 0)),
                pl.BlockSpec((None, Hkv, ts, D), lambda b, si: (b, 0, si, 0)),
            ],
        ),
        compiler_params=pltpu.CompilerParams(
            dimension_semantics=("parallel", "parallel"),
            vmem_limit_bytes=_VMEM_LIMIT),
    )(qkv3, cos_sin)


# --------------------------- GQA flash attention kernel ---------------------------

def _flash_attn_kernel(q_ref, k_ref, v_ref, o_ref, q_scr, m_scr, l_scr, acc_scr,
                       *, tq, tkv, groups, head_dim):
    G, D = groups, head_dim
    qi = pl.program_id(2)
    ki = pl.program_id(3)
    nk = pl.num_programs(3)
    q_start = qi * tq
    k_start = ki * tkv

    @pl.when(ki == 0)
    def _init():
        q = q_ref[...]                                    # (tq, G*D), RoPE'd + scaled
        # g-major stacking: row g*tq + t  <->  (query head hkv*G + g, position t)
        q_scr[...] = jnp.concatenate(
            [q[:, g * D:(g + 1) * D] for g in range(G)], axis=0)
        m_scr[...] = jnp.full_like(m_scr, -jnp.inf)
        l_scr[...] = jnp.zeros_like(l_scr)
        acc_scr[...] = jnp.zeros_like(acc_scr)

    compute_any = k_start <= q_start + tq - 1             # causal tile pruning
    needs_mask = k_start + tkv - 1 > q_start               # only diagonal tiles mask

    def _update(apply_mask):
        k = k_ref[...]                                     # (tkv, D), already RoPE'd
        v = v_ref[...]
        s = lax.dot_general(q_scr[...], k,
                            dimension_numbers=(((1,), (1,)), ((), ())),
                            preferred_element_type=jnp.float32)   # (G*tq, tkv)
        if apply_mask:
            row = q_start + lax.broadcasted_iota(jnp.int32, (tq, tkv), 0)
            col = k_start + lax.broadcasted_iota(jnp.int32, (tq, tkv), 1)
            s = jnp.where(jnp.tile(col <= row, (G, 1)), s, -jnp.inf)
        m_prev = m_scr[...]
        m_new = jnp.maximum(m_prev, jnp.max(s, axis=-1, keepdims=True))
        alpha = jnp.exp(m_prev - m_new)
        p = jnp.exp(s - m_new)
        l_scr[...] = alpha * l_scr[...] + jnp.sum(p, axis=-1, keepdims=True)
        acc_scr[...] = alpha * acc_scr[...] + jnp.dot(
            p.astype(v.dtype), v, preferred_element_type=jnp.float32)
        m_scr[...] = m_new

    @pl.when(compute_any & jnp.logical_not(needs_mask))
    def _update_interior():
        _update(False)

    @pl.when(compute_any & needs_mask)
    def _update_diagonal():
        _update(True)

    @pl.when(ki == nk - 1)
    def _finalize():
        l = l_scr[...]
        inv = pl.reciprocal(l, approx=True)
        inv = inv * (2.0 - l * inv)                        # one Newton step
        out = acc_scr[...] * inv                           # (G*tq, D), g-major rows
        o_ref[...] = jnp.concatenate(
            [out[g * tq:(g + 1) * tq, :] for g in range(G)],
            axis=-1).astype(o_ref.dtype)


def flash_attention(q_r, k_r, v_r, *, groups, head_dim):
    """q_r: (B, Hkv, S, G*D) (RoPE'd, pre-scaled); k_r, v_r: (B, Hkv, S, D).
    Returns (B, Hkv, S, G*D)."""
    B, Hkv, S, GD = q_r.shape
    G, D = groups, head_dim
    assert GD == G * D

    tq = _pick_tile(S, (256, 128, 64, 32, 16, 8))
    tkv = _pick_tile(S, (128, 64, 32, 16, 8))      # tighter kv tile: v7x VMEM headroom
    n_q, n_kv = S // tq, S // tkv
    # TODO(synk): for long S, replace the static (n_q, n_kv) grid + pl.when pruning
    # with a flat 1-D grid over valid lower-triangular tile pairs via scalar prefetch
    # (removes ~0.35 us/step overhead for pruned tiles).

    def kv_limit(qi):
        return (qi * tq + tq - 1) // tkv

    q_map = lambda b, h, qi, ki: (b, h, qi, 0)
    kv_map = lambda b, h, qi, ki: (b, h, jnp.minimum(ki, kv_limit(qi)), 0)
    o_map = lambda b, h, qi, ki: (b, h, qi, 0)

    kernel = functools.partial(_flash_attn_kernel, tq=tq, tkv=tkv,
                               groups=G, head_dim=D)

    itemsize = jnp.dtype(q_r.dtype).itemsize
    cost = pl.CostEstimate(
        flops=2 * B * Hkv * G * S * S * D,            # QK^T + PV with causal halving
        transcendentals=B * Hkv * G * S * S // 2,
        bytes_accessed=(2 * q_r.size + k_r.size + v_r.size) * itemsize,
    )

    return pl.pallas_call(
        kernel,
        out_shape=jax.ShapeDtypeStruct((B, Hkv, S, G * D), q_r.dtype),
        grid_spec=pltpu.PrefetchScalarGridSpec(
            num_scalar_prefetch=0,
            grid=(B, Hkv, n_q, n_kv),
            in_specs=[
                pl.BlockSpec((None, None, tq, G * D), q_map),
                pl.BlockSpec((None, None, tkv, D), kv_map),
                pl.BlockSpec((None, None, tkv, D), kv_map),
            ],
            out_specs=pl.BlockSpec((None, None, tq, G * D), o_map),
            scratch_shapes=[
                pltpu.VMEM((G * tq, D), q_r.dtype),      # grouped q (MXU input dtype)
                pltpu.VMEM((G * tq, 1), jnp.float32),    # running max m
                pltpu.VMEM((G * tq, 1), jnp.float32),    # running denom l
                pltpu.VMEM((G * tq, D), jnp.float32),    # output accumulator
            ],
        ),
        compiler_params=pltpu.CompilerParams(
            dimension_semantics=("parallel", "parallel", "parallel", "arbitrary"),
            vmem_limit_bytes=_VMEM_LIMIT),
        cost_estimate=cost,
    )(q_r, k_r, v_r)


# ---------------- O projection over the grouped attention layout ----------------

def _oproj_kernel(x_ref, w_ref, o_ref, acc_ref):
    h = pl.program_id(3)

    @pl.when(h == 0)
    def _init():
        acc_ref[...] = jnp.zeros_like(acc_ref)

    acc_ref[...] += jnp.dot(x_ref[...], w_ref[...],
                            preferred_element_type=jnp.float32)

    @pl.when(h == pl.num_programs(3) - 1)
    def _finalize():
        o_ref[...] = acc_ref[...].astype(o_ref.dtype)


def o_proj_grouped(attn, wo_g):
    """out[b, s, :] = sum_h attn[b, h, s, :] @ wo_g[h]   (RowParallelLayer, rank 0).
    attn: (B, Hkv, S, G*D); wo_g: (Hkv, G*D, H)."""
    B, Hkv, S, GD = attn.shape
    Hkv2, GD2, H = wo_g.shape
    assert Hkv == Hkv2 and GD == GD2

    tm = _pick_tile(S, (512, 256, 128, 64, 32, 16, 8))
    tn = _pick_tile(H, (512, 256, 128))
    itemsize = jnp.dtype(attn.dtype).itemsize
    cost = pl.CostEstimate(flops=2 * B * S * Hkv * GD * H, transcendentals=0,
                           bytes_accessed=(attn.size + wo_g.size + B * S * H) * itemsize)

    return pl.pallas_call(
        _oproj_kernel,
        out_shape=jax.ShapeDtypeStruct((B, S, H), attn.dtype),
        grid_spec=pltpu.PrefetchScalarGridSpec(
            num_scalar_prefetch=0,
            grid=(B, S // tm, H // tn, Hkv),
            in_specs=[
                pl.BlockSpec((None, None, tm, GD), lambda b, i, j, h: (b, h, i, 0)),
                pl.BlockSpec((None, GD, tn), lambda b, i, j, h: (h, 0, j)),
            ],
            out_specs=pl.BlockSpec((None, tm, tn), lambda b, i, j, h: (b, i, j)),
            scratch_shapes=[pltpu.VMEM((tm, tn), jnp.float32)],
        ),
        compiler_params=pltpu.CompilerParams(
            dimension_semantics=("parallel", "parallel", "parallel", "arbitrary"),
            vmem_limit_bytes=_VMEM_LIMIT),
        cost_estimate=cost,
    )(attn, wo_g)


# ------------------------------ full forward pass ------------------------------

def rope_cos_sin(seq_len, dim, base):
    inv_freq = 1.0 / (base ** (jnp.arange(0, dim, 2, dtype=jnp.float32) / dim))
    t = jnp.arange(seq_len, dtype=jnp.float32)
    freqs = jnp.outer(t, inv_freq)
    emb = jnp.concatenate([freqs, freqs], axis=-1)
    return jnp.cos(emb), jnp.sin(emb)


def prepare_weights(wq, wk, wv, wo, num_heads, num_kv_heads, head_dim):
    """Load-time weight prep (mirrors QKVParallelLayer/RowParallelLayer.load_weight):
    fuse QKV and pre-transpose to the (K, N) layout so no per-forward concat and no
    per-tile weight transpose is needed; group the O weight per kv head."""
    G = num_heads // num_kv_heads
    H = wq.shape[1]
    w_qkv_t = jnp.concatenate([wq, wk, wv], axis=0).T           # (H, nq + 2*nkv)
    wo_g = wo.T.reshape(num_kv_heads, G * head_dim, H)          # (Hkv, G*D, H)
    return w_qkv_t, wo_g


def llama_sdpa_attention(hidden, w_qkv_t, wo_g, num_heads, num_kv_heads,
                         rope_theta=10000.0):
    B, S, H = hidden.shape
    head_dim = H // num_heads
    G = num_heads // num_kv_heads
    scale = 1.0 / math.sqrt(head_dim)

    x2d = hidden.reshape(B * S, H)                              # free view
    qkv = linear_nn(x2d, w_qkv_t)                               # (B*S, nq + 2*nkv)
    qkv3 = qkv.reshape(B, S, qkv.shape[-1])                     # free view

    cos, sin = rope_cos_sin(S, head_dim, rope_theta)
    cos_sin = jnp.concatenate([cos, sin], axis=-1)              # packed (S, 2*D)

    q_r, k_r, v_r = rope_split(qkv3, cos_sin, num_heads, num_kv_heads,
                               head_dim, scale)
    attn = flash_attention(q_r, k_r, v_r, groups=G, head_dim=head_dim)
    out = o_proj_grouped(attn, wo_g)                            # (B, S, H)
    # TODO(synk): tensor-parallel all_reduce across comm ranks omitted
    # (world_size == 1 -> identity).
    return out


# ------------------------------ pure-JAX reference ------------------------------

def ref_forward(hidden, wq, wk, wv, wo, num_heads, num_kv_heads,
                rope_theta=10000.0):
    B, S, H = hidden.shape
    D = H // num_heads
    groups = num_heads // num_kv_heads

    q = (hidden @ wq.T).reshape(B, S, num_heads, D).transpose(0, 2, 1, 3)
    k = (hidden @ wk.T).reshape(B, S, num_kv_heads, D).transpose(0, 2, 1, 3)
    v = (hidden @ wv.T).reshape(B, S, num_kv_heads, D).transpose(0, 2, 1, 3)

    cos, sin = rope_cos_sin(S, D, rope_theta)
    cos = cos[None, None]
    sin = sin[None, None]

    def rot_half(x):
        x1, x2 = x[..., : D // 2], x[..., D // 2:]
        return jnp.concatenate([-x2, x1], axis=-1)

    q = q * cos + rot_half(q) * sin
    k = k * cos + rot_half(k) * sin

    k = jnp.repeat(k, groups, axis=1)
    v = jnp.repeat(v, groups, axis=1)

    s = jnp.einsum("bhqd,bhkd->bhqk", q, k) / math.sqrt(D)
    mask = jnp.tril(jnp.ones((S, S), dtype=bool))
    s = jnp.where(mask, s, -jnp.inf)
    p = jax.nn.softmax(s, axis=-1)
    o = jnp.einsum("bhqk,bhkd->bhqd", p, v)
    o = o.transpose(0, 2, 1, 3).reshape(B, S, num_heads * D)
    return o @ wo.T


# ------------------------------------ main ------------------------------------

if __name__ == "__main__":
    # Small config consistent with the module: hidden=32, 4 q heads, 2 kv heads
    # (GQA groups=2), head_dim=8, batch=2, seq=8.
    B, S, H = 2, 8, 32
    num_heads, num_kv_heads = 4, 2
    head_dim = H // num_heads
    rope_theta = 10000.0

    key = jax.random.PRNGKey(0)
    k_x, k_q, k_k, k_v, k_o = jax.random.split(key, 5)

    hidden = jax.random.normal(k_x, (B, S, H), dtype=jnp.float32)
    wq = 0.05 * jax.random.normal(k_q, (num_heads * head_dim, H), dtype=jnp.float32)
    wk = 0.05 * jax.random.normal(k_k, (num_kv_heads * head_dim, H), dtype=jnp.float32)
    wv = 0.05 * jax.random.normal(k_v, (num_kv_heads * head_dim, H), dtype=jnp.float32)
    wo = 0.05 * jax.random.normal(k_o, (H, num_heads * head_dim), dtype=jnp.float32)

    # Load-time weight prep (once, outside the forward).
    w_qkv_t, wo_g = prepare_weights(wq, wk, wv, wo, num_heads, num_kv_heads, head_dim)

    out = llama_sdpa_attention(hidden, w_qkv_t, wo_g, num_heads, num_kv_heads,
                               rope_theta)
    out = jax.block_until_ready(out)

    ref = ref_forward(hidden, wq, wk, wv, wo, num_heads, num_kv_heads, rope_theta)
    assert out.shape == (B, S, H)
    err = jnp.max(jnp.abs(out - ref))
    assert jnp.allclose(out, ref, atol=2e-3, rtol=2e-3), f"max err {err}"

    print("KERNEL_OK")
</pallas_src>

<mosaic_0001>
module attributes {stable_mosaic.version = 11 : i64} {
  func.func @_matmul_full_k_kernel(%arg0: i32, %arg1: i32, %arg2: memref<16x32xf32, #tpu.memory_space<vmem>>, %arg3: memref<32x64xf32, #tpu.memory_space<vmem>>, %arg4: memref<16x64xf32, #tpu.memory_space<vmem>>) attributes {dimension_semantics = [#tpu.dimension_semantics<parallel>, #tpu.dimension_semantics<parallel>], iteration_bounds = array<i64: 1, 1>, scalar_prefetch = 0 : i64, scratch_operands = 0 : i64, tpu.core_type = #tpu.core_type<tc>, window_params = [{transform_indices = @transform_0, window_bounds = array<i64: 16, 32>}, {transform_indices = @transform_1, window_bounds = array<i64: 32, 64>}, {transform_indices = @transform_2, window_bounds = array<i64: 16, 64>}]} {
    %c0 = arith.constant 0 : index
    %c0_0 = arith.constant 0 : index
    %0 = vector.load %arg2[%c0, %c0_0] : memref<16x32xf32, #tpu.memory_space<vmem>>, vector<16x32xf32>
    %c0_1 = arith.constant 0 : index
    %c0_2 = arith.constant 0 : index
    %1 = vector.load %arg3[%c0_1, %c0_2] : memref<32x64xf32, #tpu.memory_space<vmem>>, vector<32x64xf32>
    %cst = arith.constant dense<0.000000e+00> : vector<16x64xf32>
    %2 = tpu.matmul %0, %1, %cst {dimension_numbers = #tpu.dot_dimension_numbers<[1], [0], [0], [1], [0, 0, 1, 1], [], []>} : vector<16x32xf32>, vector<32x64xf32>, vector<16x64xf32> -> vector<16x64xf32>
    %c0_3 = arith.constant 0 : index
    %c0_4 = arith.constant 0 : index
    %3 = vector.load %arg4[%c0_3, %c0_4] : memref<16x64xf32, #tpu.memory_space<vmem>>, vector<16x64xf32>
    tpu.vector_store %arg4[%c0_3, %c0_4], %2 {strides = array<i32>} : memref<16x64xf32, #tpu.memory_space<vmem>>, vector<16x64xf32>,
    return
  }
  func.func @transform_0(%arg0: i32, %arg1: i32) -> (i32, i32) {
    %c0_i32 = arith.constant 0 : i32
    %c0_i32_0 = arith.constant 0 : i32
    return %arg0, %c0_i32 : i32, i32
  }
  func.func @transform_1(%arg0: i32, %arg1: i32) -> (i32, i32) {
    %c0_i32 = arith.constant 0 : i32
    %c0_i32_0 = arith.constant 0 : i32
    return %c0_i32, %arg1 : i32, i32
  }
  func.func @transform_2(%arg0: i32, %arg1: i32) -> (i32, i32) {
    %c0_i32 = arith.constant 0 : i32
    return %arg0, %arg1 : i32, i32
  }
}

</mosaic_0001>

<llo_original>
// kernel: tpu_custom_call.1
$region0: #{tpu_custom_call.1}
  #allocation0 [shape = 'u32[]', space=smem, size = 0x4, offset = 0x4, fixed_abs, tag = 'smem constant byte address 0x4 - core index']
  #allocation1 [shape = 'u32[144,128]{1,0:T(1,128)}', space=vmem, size = 0x12000, scoped, tag = 'internal scratch']
  %s0 = inlined_call_operand.hbm [shape: f32[16,32], index: 0, kind: input, shape index: {}]
  %s1 = inlined_call_operand.hbm [shape: f32[32,64], index: 1, kind: input, shape index: {}]
  %s2 = inlined_call_operand.hbm [shape: f32[16,64], index: 2, kind: output, shape index: {}]
  %s3 = sld [smem:[#allocation0]]
  $region26: #{tpu_custom_call.1} parent=0
    _
  %s5 = ssub.s32 1, %s3
  %s6 = scalar_select 0, %s5, %s3
  $region1: #{tpu_custom_call.1} parent=0
    #allocation2 [shape = 'u8[8192]{0}', space=vmem, size = 0x2000, scoped, tag = 'input window, operand 0, single buffered']
    #allocation3 [shape = 's32[1]{0}', space=sflag, size = 0x4, scoped, tag = 'scoped memory for tpu_custom_call.1']
    #allocation4 [shape = 's32[1]{0}', space=sflag, size = 0x4, scoped, tag = 'scoped memory for tpu_custom_call.1']
    #allocation5 [shape = 'u8[16384]{0}', space=vmem, size = 0x4000, scoped, tag = 'input window, operand 1, single buffered']
    #allocation6 [shape = 's32[1]{0}', space=sflag, size = 0x4, scoped, tag = 'scoped memory for tpu_custom_call.1']
    #allocation7 [shape = 'u8[8192]{0}', space=vmem, size = 0x2000, scoped, tag = 'output window, operand 0, single buffered']
    %7 = vsyncpa [#allocation3], 0
    %8 = vsyncpa [#allocation6], 0
    %9 = vsyncpa [#allocation4], 0
    // Predicated region
    $region2: #{tpu_custom_call.1} parent=1 // pred_check
      _
    $region3: #{tpu_custom_call.1} parent=1 // pred_check_branch
      %11 = sbr.rel (0) target = $region5
    $region4: #{tpu_custom_call.1} parent=1 // pred_region
      %s13 = ssub.s32 256, 256
      %14 = vsyncadd [#allocation3], %s13
      %s15 = sshll.u32 [#allocation2], 4
      %s16 = int_to_ptr.vmem [resolvable:$true] %s15
      %21 = dma.hbm_to_vmem [thread:$0]  %s0, 256, %s16, [#allocation3], 128, 128, 8
    $region5: #{tpu_custom_call.1} parent=1 // pred_fallthru
      _
    // Predicated region
    $region6: #{tpu_custom_call.1} parent=1 // pred_check
      _
    $region7: #{tpu_custom_call.1} parent=1 // pred_check_branch
      %23 = sbr.rel (0) target = $region9
    $region8: #{tpu_custom_call.1} parent=1 // pred_region
      %s25 = ssub.s32 512, 512
      %26 = vsyncadd [#allocation6], %s25
      %s27 = sshll.u32 [#allocation5], 4
      %s28 = int_to_ptr.vmem [resolvable:$true] %s27
      %33 = dma.hbm_to_vmem [thread:$0]  %s1, 512, %s28, [#allocation6], 128, 128, 8
    $region9: #{tpu_custom_call.1} parent=1 // pred_fallthru
      _
    // Predicated region
    $region10: #{tpu_custom_call.1} parent=1 // pred_check
      _
    $region11: #{tpu_custom_call.1} parent=1 // pred_check_branch
      %35 = sbr.rel (0) target = $region13
    $region12: #{tpu_custom_call.1} parent=1 // pred_region
      %36 = dma.done [#allocation3], 256
    $region13: #{tpu_custom_call.1} parent=1 // pred_fallthru
      _
    // Predicated region
    $region14: #{tpu_custom_call.1} parent=1 // pred_check
      _
    $region15: #{tpu_custom_call.1} parent=1 // pred_check_branch
      %38 = sbr.rel (0) target = $region17
    $region16: #{tpu_custom_call.1} parent=1 // pred_region
      %39 = dma.done [#allocation6], 512
    $region17: #{tpu_custom_call.1} parent=1 // pred_fallthru
      _
    %v40 = vld [vmem:[#allocation2] sm:$0xff]
    %v41 = vld [vmem:[#allocation2 + $0x8] sm:$0xff]
    %v42 = vld [vmem:[#allocation5] sm:$0xff]
    %v43 = vld [vmem:[#allocation5 + $0x8] sm:$0xff]
    %v44 = vld [vmem:[#allocation5 + $0x10] sm:$0xff]
    %v45 = vld [vmem:[#allocation5 + $0x18] sm:$0xff]
    %vm46 = vcmask 261120
    %v48 = vsel %vm46, %v40, 0
    %v51 = vsel %vm46, %v41, 0
    %53 = vmatprep.subr.mxu0 0.0
    %54 = vmatpush1.msra.mxu0 %v42
    %55 = vmatprep.subr.mxu0 0.0
    %56 = vmatpush1.msra.mxu0 %v43
    %57 = vmatprep.subr.mxu0 0.0
    %58 = vmatpush1.msra.mxu0 %v44
    %59 = vmatprep.subr.mxu0 0.0
    %60 = vmatpush1.msra.mxu0 %v45
    %61 = vmatprep.subr.mxu0 0.0
    %62 = vmatpush1.msra.mxu0 0.0
    %63 = vmatprep.subr.mxu0 0.0
    %64 = vmatpush1.msra.mxu0 0.0
    %65 = vmatprep.subr.mxu0 0.0
    %66 = vmatpush1.msra.mxu0 0.0
    %67 = vmatprep.subr.mxu0 0.0
    %68 = vmatpush1.msra.mxu0 0.0
    %69 = vmatprep.subr.mxu0 0.0
    %70 = vmatpush1.msra.mxu0 0.0
    %71 = vmatprep.subr.mxu0 0.0
    %72 = vmatpush1.msra.mxu0 0.0
    %73 = vmatprep.subr.mxu0 0.0
    %74 = vmatpush1.msra.mxu0 0.0
    %75 = vmatprep.subr.mxu0 0.0
    %76 = vmatpush1.msra.mxu0 0.0
    %77 = vmatprep.subr.mxu0 0.0
    %78 = vmatpush1.msra.mxu0 0.0
    %79 = vmatprep.subr.mxu0 0.0
    %80 = vmatpush1.msra.mxu0 0.0
    %81 = vmatprep.subr.mxu0 0.0
    %82 = vmatpush1.msra.mxu0 0.0
    %83 = vmatprep.subr.mxu0 0.0
    %84 = vmatpush1.msra.mxu0 0.0
    %85 = vmatprep.subr.mxu0 0.0
    %86 = vmatpush1.msra.mxu0 0.0
    %87 = vmatprep.subr.mxu0 0.0
    %88 = vmatpush1.msra.mxu0 0.0
    %89 = vmatprep.subr.mxu0 0.0
    %90 = vmatpush1.msra.mxu0 0.0
    %91 = vmatprep.subr.mxu0 0.0
    %92 = vmatpush1.msra.mxu0 0.0
    %93 = vmatprep.subr.mxu0 0.0
    %94 = vmatpush1.msra.mxu0 0.0
    %95 = vmatprep.subr.mxu0 0.0
    %96 = vmatpush1.msra.mxu0 0.0
    %97 = vmatprep.subr.mxu0 0.0
    %98 = vmatpush1.msra.mxu0 0.0
    %99 = vmatprep.subr.mxu0 0.0
    %100 = vmatpush1.msra.mxu0 0.0
    %101 = vmatprep.subr.mxu0 0.0
    %102 = vmatpush1.msra.mxu0 0.0
    %103 = vmatprep.subr.mxu0 0.0
    %104 = vmatpush1.msra.mxu0 0.0
    %105 = vmatprep.subr.mxu0 0.0
    %106 = vmatpush1.msra.mxu0 0.0
    %107 = vmatprep.subr.mxu0 0.0
    %108 = vmatpush1.msra.mxu0 0.0
    %109 = vmatprep.subr.mxu0 0.0
    %110 = vmatpush1.msra.mxu0 0.0
    %111 = vmatprep.subr.mxu0 0.0
    %112 = vmatpush1.msra.mxu0 0.0
    %113 = vmatprep.subr.mxu0 0.0
    %114 = vmatpush1.msra.mxu0 0.0
    %115 = vmatprep.subr.mxu0 0.0
    %116 = vmatpush1.msra.mxu0 0.0
    %117 = vmatprep.mubr.f32.mxu0 0.0
    %118 = vmatmul.mubr.f32.gmra.mrb[0].mxu0 %v48
    %v119 = vpop.f32.mrb[0].mxu0
    %v120 = vadd.f32 0.0, %v119
    %v121 = vpop.f32.mrb[0].mxu0
    %122 = vmatprep.mubr.f32.mxu0 0.0
    %123 = vmatmul.mubr.f32.gmra.mrb[0].mxu0 %v51
    %v124 = vpop.f32.mrb[0].mxu0
    %v125 = vadd.f32 0.0, %v124
    %v126 = vpop.f32.mrb[0].mxu0
    %127 = vdwg.mxu0
    %vm128 = vcmask 523264
    %129 = vst.msk [vmem:[#allocation7] sm:$0xff] %vm128, %v120
    %130 = vst.msk [vmem:[#allocation7 + $0x8] sm:$0xff] %vm128, %v125
    // Predicated region
    $region18: #{tpu_custom_call.1} parent=1 // pred_check
      _
    $region19: #{tpu_custom_call.1} parent=1 // pred_check_branch
      %132 = sbr.rel (0) target = $region21
    $region20: #{tpu_custom_call.1} parent=1 // pred_region
      %s134 = ssub.s32 256, 256
      %135 = vsyncadd [#allocation4], %s134
      %s136 = sshll.u32 [#allocation7], 4
      %s137 = int_to_ptr.vmem [resolvable:$true] %s136
      %142 = dma.vmem_to_hbm [thread:$0]  %s137, 256, %s2, [#allocation4], 128, 128, 8
    $region21: #{tpu_custom_call.1} parent=1 // pred_fallthru
      _
    // Predicated region
    $region22: #{tpu_custom_call.1} parent=1 // pred_check
      _
    $region23: #{tpu_custom_call.1} parent=1 // pred_check_branch
      %144 = sbr.rel (0) target = $region25
    $region24: #{tpu_custom_call.1} parent=1 // pred_region
      %145 = dma.done [#allocation4], 256
    $region25: #{tpu_custom_call.1} parent=1 // pred_fallthru
      _
    %146 = vsyncpa [#allocation3], 1
    %147 = vsyncpa [#allocation6], 1
    %148 = vsyncpa [#allocation4], 1

</llo_original>
